<compile_context>
chip_gen: v6e
topology: v6e:2x2x1
jax: 0.10.0
libtpu: 0.0.40
codegen_flags: <defaults>
</compile_context>

<pallas_src>
import jax
import jax.numpy as jnp
from jax.experimental import pallas as pl
from jax.experimental.pallas import tpu as pltpu


def _round_up(x: int, m: int) -> int:
    return ((x + m - 1) // m) * m


def _choose_tm(batch: int) -> int:
    """Batch tile: multiple of 16 (bf16 sublane packing), small padding,
    and >= 2 grid steps along the batch axis for large batches (v7x megacore)."""
    batch16 = _round_up(batch, 16)
    if batch16 <= 256:
        return batch16                      # single M step, <= 15 rows of pad
    best_tm, best_cost = None, None
    for cand in (256, 128, 64, 32, 16):
        padded = _round_up(batch, cand)
        steps = padded // cand
        # pad rows cost HBM bytes; each grid step costs ~0.35us (~128 rows of x
        # traffic at typical widths) -> balance the two.
        cost = (padded - batch) + 128 * steps
        if best_cost is None or cost < best_cost:
            best_tm, best_cost = cand, cost
    return best_tm


def _linear_kernel(x_ref, w_ref, b_ref, o_ref):
    # Single K step: weight/bias block indices are constant along the batch
    # axis, so Pallas keeps them VMEM-resident; no accumulator scratch needed.
    o_ref[...] = (
        jnp.dot(x_ref[...], w_ref[...], preferred_element_type=jnp.float32)
        + b_ref[...].astype(jnp.float32)
    ).astype(o_ref.dtype)


def _linear_kernel_kloop(x_ref, w_ref, b_ref, o_ref, acc_ref):
    # Fallback for very wide input_dim: K is a grid axis with an f32 accumulator.
    k = pl.program_id(2)
    part = jnp.dot(x_ref[...], w_ref[...], preferred_element_type=jnp.float32)

    @pl.when(k == 0)
    def _():
        acc_ref[...] = part                 # assign (no zero-init round trip)

    @pl.when(k > 0)
    def _():
        acc_ref[...] += part

    @pl.when(k == pl.num_programs(2) - 1)
    def _():
        o_ref[...] = (acc_ref[...] + b_ref[...].astype(jnp.float32)).astype(o_ref.dtype)


def logistic_regression_forward(x, weight, bias):
    """outputs = x @ weight.T + bias  (torch nn.Linear forward).

    x:      (..., input_dim)          float32 or bfloat16
    weight: (output_dim, input_dim)   torch nn.Linear layout (NOT transposed)
    bias:   (output_dim,)
    Returns float32 logits of shape (..., output_dim).
    """
    lead_shape = x.shape[:-1]
    input_dim = x.shape[-1]
    x2 = x.reshape(-1, input_dim)
    batch = x2.shape[0]
    output_dim, w_in = weight.shape
    assert w_in == input_dim, "weight/input dim mismatch"

    in_dtype = x2.dtype

    # ---- tile / padded dims ------------------------------------------------
    d_out_p = _round_up(output_dim, 128)        # lane-dense output (unmasked vst)
    tn = min(d_out_p, 256)                      # whole weight resident up to 256 classes
    d_out_p = _round_up(d_out_p, tn)

    d_in_128 = _round_up(input_dim, 128)
    if d_in_128 <= 2048:
        tk = d_in_128                           # single K step -> W stays resident
        d_in_p = d_in_128
    else:
        tk = 1024
        d_in_p = _round_up(input_dim, tk)

    tm = _choose_tm(batch)
    batch_p = _round_up(batch, tm)

    # ---- pad operands only when actually required --------------------------
    x_p = x2
    if (batch_p, d_in_p) != (batch, input_dim):
        x_p = jnp.pad(x2, ((0, batch_p - batch), (0, d_in_p - input_dim)))

    # One-time tiny transpose so the kernel runs a standard (M,K)x(K,N) dot.
    w_t = weight.T.astype(in_dtype)             # (input_dim, output_dim)
    if (d_in_p, d_out_p) != (input_dim, output_dim):
        w_t = jnp.pad(w_t, ((0, d_in_p - input_dim), (0, d_out_p - output_dim)))

    b_p = bias.astype(jnp.float32)
    if d_out_p != output_dim:
        b_p = jnp.pad(b_p, (0, d_out_p - output_dim))
    b_p = b_p.reshape(1, d_out_p)

    nm, nn, nk = batch_p // tm, d_out_p // tn, d_in_p // tk

    itemsize = jnp.dtype(in_dtype).itemsize
    flops = 2 * batch_p * d_in_p * d_out_p
    bytes_accessed = (itemsize * (batch_p * d_in_p + d_in_p * d_out_p)
                      + 4 * (batch_p * d_out_p + d_out_p))
    cost = pl.CostEstimate(flops=flops, transcendentals=0,
                           bytes_accessed=bytes_accessed)
    cparams = pltpu.CompilerParams(
        dimension_semantics=(("parallel", "parallel") if nk == 1
                             else ("parallel", "parallel", "arbitrary")),
        vmem_limit_bytes=32 * 1024 * 1024,
    )

    if nk == 1:
        out_p = pl.pallas_call(
            _linear_kernel,
            out_shape=jax.ShapeDtypeStruct((batch_p, d_out_p), jnp.float32),
            grid=(nm, nn),
            in_specs=[
                pl.BlockSpec((tm, tk), lambda i, j: (i, 0)),   # x tile (streamed)
                pl.BlockSpec((tk, tn), lambda i, j: (0, j)),   # weight tile (resident)
                pl.BlockSpec((1, tn), lambda i, j: (0, j)),    # bias (resident)
            ],
            out_specs=pl.BlockSpec((tm, tn), lambda i, j: (i, j)),
            compiler_params=cparams,
            cost_estimate=cost,
        )(x_p, w_t, b_p)
    else:
        out_p = pl.pallas_call(
            _linear_kernel_kloop,
            out_shape=jax.ShapeDtypeStruct((batch_p, d_out_p), jnp.float32),
            grid=(nm, nn, nk),
            in_specs=[
                pl.BlockSpec((tm, tk), lambda i, j, k: (i, k)),
                pl.BlockSpec((tk, tn), lambda i, j, k: (k, j)),
                pl.BlockSpec((1, tn), lambda i, j, k: (0, j)),
            ],
            out_specs=pl.BlockSpec((tm, tn), lambda i, j, k: (i, j)),
            scratch_shapes=[pltpu.VMEM((tm, tn), jnp.float32)],
            compiler_params=cparams,
            cost_estimate=cost,
        )(x_p, w_t, b_p)

    out = out_p
    if batch_p != batch or d_out_p != output_dim:
        out = out_p[:batch, :output_dim]        # slice only when we padded
    return out.reshape(*lead_shape, output_dim)


if __name__ == "__main__":
    key = jax.random.PRNGKey(0)
    kx, kw, kb = jax.random.split(key, 3)

    batch, input_dim, output_dim = 8, 32, 4

    x = jax.random.normal(kx, (batch, input_dim), dtype=jnp.float32)
    # Deterministic "nn.Linear"-style init (uniform in [-1/sqrt(in), 1/sqrt(in)]).
    bound = 1.0 / jnp.sqrt(jnp.float32(input_dim))
    weight = jax.random.uniform(
        kw, (output_dim, input_dim), minval=-bound, maxval=bound, dtype=jnp.float32
    )
    bias = jax.random.uniform(
        kb, (output_dim,), minval=-bound, maxval=bound, dtype=jnp.float32
    )

    out = logistic_regression_forward(x, weight, bias)
    out = jax.block_until_ready(out)

    # Reference check against plain JAX.
    ref = x @ weight.T + bias
    assert out.shape == (batch, output_dim)
    assert out.dtype == jnp.float32
    assert jnp.allclose(out, ref, atol=1e-4, rtol=1e-4)

    print("KERNEL_OK")
</pallas_src>

<mosaic_0001>
module attributes {stable_mosaic.version = 11 : i64} {
  func.func @_linear_kernel(%arg0: i32, %arg1: i32, %arg2: memref<16x128xf32, #tpu.memory_space<vmem>>, %arg3: memref<128x128xf32, #tpu.memory_space<vmem>>, %arg4: memref<1x128xf32, #tpu.memory_space<vmem>>, %arg5: memref<16x128xf32, #tpu.memory_space<vmem>>) attributes {dimension_semantics = [#tpu.dimension_semantics<parallel>, #tpu.dimension_semantics<parallel>], iteration_bounds = array<i64: 1, 1>, scalar_prefetch = 0 : i64, scratch_operands = 0 : i64, tpu.core_type = #tpu.core_type<tc>, window_params = [{transform_indices = @transform_0, window_bounds = array<i64: 16, 128>}, {transform_indices = @transform_1, window_bounds = array<i64: 128, 128>}, {transform_indices = @transform_2, window_bounds = array<i64: 1, 128>}, {transform_indices = @transform_3, window_bounds = array<i64: 16, 128>}]} {
    %c0 = arith.constant 0 : index
    %c0_0 = arith.constant 0 : index
    %0 = vector.load %arg2[%c0, %c0_0] : memref<16x128xf32, #tpu.memory_space<vmem>>, vector<16x128xf32>
    %c0_1 = arith.constant 0 : index
    %c0_2 = arith.constant 0 : index
    %1 = vector.load %arg3[%c0_1, %c0_2] : memref<128x128xf32, #tpu.memory_space<vmem>>, vector<128x128xf32>
    %cst = arith.constant dense<0.000000e+00> : vector<16x128xf32>
    %2 = tpu.matmul %0, %1, %cst {dimension_numbers = #tpu.dot_dimension_numbers<[1], [0], [0], [1], [0, 0, 1, 1], [], []>} : vector<16x128xf32>, vector<128x128xf32>, vector<16x128xf32> -> vector<16x128xf32>
    %c0_3 = arith.constant 0 : index
    %c0_4 = arith.constant 0 : index
    %3 = vector.load %arg4[%c0_3, %c0_4] : memref<1x128xf32, #tpu.memory_space<vmem>>, vector<1x128xf32>
    %4 = vector.broadcast %3 : vector<1x128xf32> to vector<16x128xf32>
    %5 = arith.addf %2, %4 : vector<16x128xf32>
    %c0_5 = arith.constant 0 : index
    %c0_6 = arith.constant 0 : index
    %6 = vector.load %arg5[%c0_5, %c0_6] : memref<16x128xf32, #tpu.memory_space<vmem>>, vector<16x128xf32>
    tpu.vector_store %arg5[%c0_5, %c0_6], %5 {strides = array<i32>} : memref<16x128xf32, #tpu.memory_space<vmem>>, vector<16x128xf32>,
    return
  }
  func.func @transform_0(%arg0: i32, %arg1: i32) -> (i32, i32) {
    %c0_i32 = arith.constant 0 : i32
    %c0_i32_0 = arith.constant 0 : i32
    return %arg0, %c0_i32 : i32, i32
  }
  func.func @transform_1(%arg0: i32, %arg1: i32) -> (i32, i32) {
    %c0_i32 = arith.constant 0 : i32
    %c0_i32_0 = arith.constant 0 : i32
    return %c0_i32, %arg1 : i32, i32
  }
  func.func @transform_2(%arg0: i32, %arg1: i32) -> (i32, i32) {
    %c0_i32 = arith.constant 0 : i32
    %c0_i32_0 = arith.constant 0 : i32
    return %c0_i32, %arg1 : i32, i32
  }
  func.func @transform_3(%arg0: i32, %arg1: i32) -> (i32, i32) {
    %c0_i32 = arith.constant 0 : i32
    return %arg0, %arg1 : i32, i32
  }
}

</mosaic_0001>

<llo_original>
// kernel: tpu_custom_call.1
$region0: #{tpu_custom_call.1}
  #allocation0 [shape = 'u32[]', space=smem, size = 0x4, offset = 0x4, fixed_abs, tag = 'smem constant byte address 0x4 - core index']
  #allocation1 [shape = 'u32[144,128]{1,0:T(1,128)}', space=vmem, size = 0x12000, scoped, tag = 'internal scratch']
  %s0 = inlined_call_operand.hbm [shape: f32[16,128], index: 0, kind: input, shape index: {}]
  %s1 = inlined_call_operand.hbm [shape: f32[128,128], index: 1, kind: input, shape index: {}]
  %s2 = inlined_call_operand.vmem [shape: f32[1,128], index: 2, kind: input, shape index: {}]
  %s3 = inlined_call_operand.hbm [shape: f32[16,128], index: 3, kind: output, shape index: {}]
  %s4 = sld [smem:[#allocation0]]
  $region30: #{tpu_custom_call.1} parent=0
    _
  %s6 = ssub.s32 1, %s4
  %s7 = scalar_select 0, %s6, %s4
  $region1: #{tpu_custom_call.1} parent=0
    #allocation2 [shape = 'u8[8192]{0}', space=vmem, size = 0x2000, scoped, tag = 'input window, operand 0, single buffered']
    #allocation3 [shape = 's32[1]{0}', space=sflag, size = 0x4, scoped, tag = 'scoped memory for tpu_custom_call.1']
    #allocation4 [shape = 's32[1]{0}', space=sflag, size = 0x4, scoped, tag = 'scoped memory for tpu_custom_call.1']
    #allocation5 [shape = 'u8[65536]{0}', space=vmem, size = 0x10000, scoped, tag = 'input window, operand 1, single buffered']
    #allocation6 [shape = 's32[1]{0}', space=sflag, size = 0x4, scoped, tag = 'scoped memory for tpu_custom_call.1']
    #allocation7 [shape = 'u8[8192]{0}', space=vmem, size = 0x2000, scoped, tag = 'output window, operand 0, single buffered']
    %8 = vsyncpa [#allocation3], 0
    %9 = vsyncpa [#allocation6], 0
    %10 = vsyncpa [#allocation4], 0
    // Predicated region
    $region2: #{tpu_custom_call.1} parent=1 // pred_check
      _
    $region3: #{tpu_custom_call.1} parent=1 // pred_check_branch
      %12 = sbr.rel (0) target = $region5
    $region4: #{tpu_custom_call.1} parent=1 // pred_region
      %s14 = ssub.s32 256, 256
      %15 = vsyncadd [#allocation3], %s14
      %s16 = sshll.u32 [#allocation2], 4
      %s17 = int_to_ptr.vmem [resolvable:$true] %s16
      %22 = dma.hbm_to_vmem [thread:$0]  %s0, 256, %s17, [#allocation3], 128, 128, 8
    $region5: #{tpu_custom_call.1} parent=1 // pred_fallthru
      _
    // Predicated region
    $region6: #{tpu_custom_call.1} parent=1 // pred_check
      _
    $region7: #{tpu_custom_call.1} parent=1 // pred_check_branch
      %24 = sbr.rel (0) target = $region9
    $region8: #{tpu_custom_call.1} parent=1 // pred_region
      %s26 = ssub.s32 2048, 2048
      %27 = vsyncadd [#allocation6], %s26
      %s28 = sshll.u32 [#allocation5], 4
      %s29 = int_to_ptr.vmem [resolvable:$true] %s28
      %34 = dma.hbm_to_vmem [thread:$0]  %s1, 2048, %s29, [#allocation6], 128, 128, 8
    $region9: #{tpu_custom_call.1} parent=1 // pred_fallthru
      _
    // Predicated region
    $region10: #{tpu_custom_call.1} parent=1 // pred_check
      _
    $region11: #{tpu_custom_call.1} parent=1 // pred_check_branch
      %36 = sbr.rel (0) target = $region13
    $region12: #{tpu_custom_call.1} parent=1 // pred_region
      _
    $region13: #{tpu_custom_call.1} parent=1 // pred_fallthru
      _
    // Predicated region
    $region14: #{tpu_custom_call.1} parent=1 // pred_check
      _
    $region15: #{tpu_custom_call.1} parent=1 // pred_check_branch
      %38 = sbr.rel (0) target = $region17
    $region16: #{tpu_custom_call.1} parent=1 // pred_region
      %39 = dma.done [#allocation3], 256
    $region17: #{tpu_custom_call.1} parent=1 // pred_fallthru
      _
    // Predicated region
    $region18: #{tpu_custom_call.1} parent=1 // pred_check
      _
    $region19: #{tpu_custom_call.1} parent=1 // pred_check_branch
      %41 = sbr.rel (0) target = $region21
    $region20: #{tpu_custom_call.1} parent=1 // pred_region
      %42 = dma.done [#allocation6], 2048
    $region21: #{tpu_custom_call.1} parent=1 // pred_fallthru
      _
    %v43 = vld [vmem:[#allocation2] sm:$0xff]
    %v44 = vld [vmem:[#allocation2 + $0x8] sm:$0xff]
    %v45 = vld [vmem:[#allocation5] sm:$0xff]
    %v46 = vld [vmem:[#allocation5 + $0x8] sm:$0xff]
    %v47 = vld [vmem:[#allocation5 + $0x10] sm:$0xff]
    %v48 = vld [vmem:[#allocation5 + $0x18] sm:$0xff]
    %v49 = vld [vmem:[#allocation5 + $0x20] sm:$0xff]
    %v50 = vld [vmem:[#allocation5 + $0x28] sm:$0xff]
    %v51 = vld [vmem:[#allocation5 + $0x30] sm:$0xff]
    %v52 = vld [vmem:[#allocation5 + $0x38] sm:$0xff]
    %v53 = vld [vmem:[#allocation5 + $0x40] sm:$0xff]
    %v54 = vld [vmem:[#allocation5 + $0x48] sm:$0xff]
    %v55 = vld [vmem:[#allocation5 + $0x50] sm:$0xff]
    %v56 = vld [vmem:[#allocation5 + $0x58] sm:$0xff]
    %v57 = vld [vmem:[#allocation5 + $0x60] sm:$0xff]
    %v58 = vld [vmem:[#allocation5 + $0x68] sm:$0xff]
    %v59 = vld [vmem:[#allocation5 + $0x70] sm:$0xff]
    %v60 = vld [vmem:[#allocation5 + $0x78] sm:$0xff]
    %v61 = vld [vmem:[%s2] sm:$0x1]
    %v63 = vlaneseq
    %v64 = vshrl.u32 %v63, 7
    %v65 = vsub.s32 0, %v64
    %v66 = vrot.slane %v61, %v65
    %68 = vmatprep.subr.mxu0 0.0
    %69 = vmatpush1.msra.mxu0 %v60
    %70 = vmatprep.subr.mxu0 0.0
    %71 = vmatpush1.msra.mxu0 %v59
    %72 = vmatprep.subr.mxu0 0.0
    %73 = vmatpush1.msra.mxu0 %v58
    %74 = vmatprep.subr.mxu0 0.0
    %75 = vmatpush1.msra.mxu0 %v57
    %76 = vmatprep.subr.mxu0 0.0
    %77 = vmatpush1.msra.mxu0 %v56
    %78 = vmatprep.subr.mxu0 0.0
    %79 = vmatpush1.msra.mxu0 %v55
    %80 = vmatprep.subr.mxu0 0.0
    %81 = vmatpush1.msra.mxu0 %v54
    %82 = vmatprep.subr.mxu0 0.0
    %83 = vmatpush1.msra.mxu0 %v53
    %84 = vmatprep.subr.mxu0 0.0
    %85 = vmatpush1.msra.mxu0 %v52
    %86 = vmatprep.subr.mxu0 0.0
    %87 = vmatpush1.msra.mxu0 %v51
    %88 = vmatprep.subr.mxu0 0.0
    %89 = vmatpush1.msra.mxu0 %v50
    %90 = vmatprep.subr.mxu0 0.0
    %91 = vmatpush1.msra.mxu0 %v49
    %92 = vmatprep.subr.mxu0 0.0
    %93 = vmatpush1.msra.mxu0 %v48
    %94 = vmatprep.subr.mxu0 0.0
    %95 = vmatpush1.msra.mxu0 %v47
    %96 = vmatprep.subr.mxu0 0.0
    %97 = vmatpush1.msra.mxu0 %v46
    %98 = vmatprep.subr.mxu0 0.0
    %99 = vmatpush1.msra.mxu0 %v45
    %100 = vmatprep.subr.mxu0 0.0
    %101 = vmatpush2.msra.mxu0 0.0
    %102 = vmatprep.subr.mxu0 0.0
    %103 = vmatpush2.msra.mxu0 0.0
    %104 = vmatprep.subr.mxu0 0.0
    %105 = vmatpush2.msra.mxu0 0.0
    %106 = vmatprep.subr.mxu0 0.0
    %107 = vmatpush2.msra.mxu0 0.0
    %108 = vmatprep.subr.mxu0 0.0
    %109 = vmatpush2.msra.mxu0 0.0
    %110 = vmatprep.subr.mxu0 0.0
    %111 = vmatpush2.msra.mxu0 0.0
    %112 = vmatprep.subr.mxu0 0.0
    %113 = vmatpush2.msra.mxu0 0.0
    %114 = vmatprep.subr.mxu0 0.0
    %115 = vmatpush2.msra.mxu0 0.0
    %116 = vmatprep.subr.mxu0 0.0
    %117 = vmatpush2.msra.mxu0 0.0
    %118 = vmatprep.subr.mxu0 0.0
    %119 = vmatpush2.msra.mxu0 0.0
    %120 = vmatprep.subr.mxu0 0.0
    %121 = vmatpush2.msra.mxu0 0.0
    %122 = vmatprep.subr.mxu0 0.0
    %123 = vmatpush2.msra.mxu0 0.0
    %124 = vmatprep.subr.mxu0 0.0
    %125 = vmatpush2.msra.mxu0 0.0
    %126 = vmatprep.subr.mxu0 0.0
    %127 = vmatpush2.msra.mxu0 0.0
    %128 = vmatprep.subr.mxu0 0.0
    %129 = vmatpush2.msra.mxu0 0.0
    %130 = vmatprep.subr.mxu0 0.0
    %131 = vmatpush2.msra.mxu0 0.0
    %132 = vmatprep.mubr.f32.mxu0 0.0
    %133 = vmatmul.mubr.f32.gmra.mxu0 %v43
    %v134 = vpop.f32.mrf.mxu0
    %v135 = vadd.f32 %v66, %v134
    %v136 = vpop.f32.mrf.mxu0
    %137 = vmatprep.mubr.f32.mxu0 0.0
    %138 = vmatmul.mubr.f32.gmra.mxu0 %v44
    %v139 = vpop.f32.mrf.mxu0
    %v140 = vadd.f32 %v66, %v139
    %v141 = vpop.f32.mrf.mxu0
    %142 = vdwg.mxu0
    %143 = vst [vmem:[#allocation7] sm:$0xff] %v135
    %144 = vst [vmem:[#allocation7 + $0x8] sm:$0xff] %v140
    // Predicated region
    $region22: #{tpu_custom_call.1} parent=1 // pred_check
      _
    $region23: #{tpu_custom_call.1} parent=1 // pred_check_branch
      %146 = sbr.rel (0) target = $region25
    $region24: #{tpu_custom_call.1} parent=1 // pred_region
      %s148 = ssub.s32 256, 256
      %149 = vsyncadd [#allocation4], %s148
      %s150 = sshll.u32 [#allocation7], 4
      %s151 = int_to_ptr.vmem [resolvable:$true] %s150
      %156 = dma.vmem_to_hbm [thread:$0]  %s151, 256, %s3, [#allocation4], 128, 128, 8
    $region25: #{tpu_custom_call.1} parent=1 // pred_fallthru
      _
    // Predicated region
    $region26: #{tpu_custom_call.1} parent=1 // pred_check
      _
    $region27: #{tpu_custom_call.1} parent=1 // pred_check_branch
      %158 = sbr.rel (0) target = $region29
    $region28: #{tpu_custom_call.1} parent=1 // pred_region
      %159 = dma.done [#allocation4], 256
    $region29: #{tpu_custom_call.1} parent=1 // pred_fallthru
      _
    %160 = vsyncpa [#allocation3], 1
    %161 = vsyncpa [#allocation6], 1
    %162 = vsyncpa [#allocation4], 1

</llo_original>
